<compile_context>
chip_gen: v7x
topology: tpu7x:2x2x1
jax: 0.10.0
libtpu: 0.0.40
codegen_flags: <defaults>
</compile_context>

<pallas_src>
import functools

import jax
import jax.numpy as jnp
from jax.experimental import pallas as pl
from jax.experimental.pallas import tpu as pltpu

LANE = 128      # TPU lane width (last dim of a vreg)
SUBLANE = 8     # f32 sublane tile (second-to-last dim)


def _round_up(n, m):
    return (n + m - 1) // m * m


def _mlp_kernel(xT_ref, w1_ref, b1_ref, w2_ref, b2_ref, o_ref):
    # xT_ref: (IN,   TB) bf16      w1_ref: (HID,   IN)  bf16   b1_ref: (HID,   1) f32
    # w2_ref: (OUT_P, HID) bf16    b2_ref: (OUT_P, 1)   f32    o_ref:  (OUT_P, TB) f32
    h = jnp.dot(w1_ref[...], xT_ref[...], preferred_element_type=jnp.float32)
    h = jnp.maximum(h + b1_ref[...], 0.0)                    # bias + ReLU in f32 (VPU)
    out = jnp.dot(w2_ref[...], h.astype(jnp.bfloat16),
                  preferred_element_type=jnp.float32)
    o_ref[...] = (out + b2_ref[...]).astype(o_ref.dtype)


def prepare_params(w1, b1, w2, b2):
    """One-time (init-time) parameter prep.

    Takes PyTorch nn.Linear layouts (w: (out, in), b: (out,)) and returns
    bf16 weights in their NATIVE (out, in) layout (no transpose needed with the
    batch-on-lanes kernel) plus f32 column biases.  W2/b2 are zero-padded to 8
    output rows so padded output rows are exactly zero.
    """
    hid, in_f = w1.shape
    out_f = w2.shape[0]
    out_p = _round_up(out_f, SUBLANE)

    w1_p = jnp.asarray(w1, jnp.bfloat16)                              # (hid, in_f)
    b1_p = jnp.asarray(b1, jnp.float32).reshape(hid, 1)               # (hid, 1)
    w2_p = jnp.zeros((out_p, hid), jnp.bfloat16).at[:out_f, :].set(
        jnp.asarray(w2, jnp.bfloat16))                                # (out_p, hid)
    b2_p = jnp.zeros((out_p, 1), jnp.float32).at[:out_f, 0].set(
        jnp.asarray(b2, jnp.float32))                                 # (out_p, 1)
    return w1_p, b1_p, w2_p, b2_p


@functools.partial(jax.jit, static_argnames=("out_features", "block_b"))
def linear_qnet_forward(x, w1_p, b1_p, w2_p, b2_p, *, out_features, block_b=1024):
    """Forward pass. `w*_p`/`b*_p` come from prepare_params (called once)."""
    squeeze = x.ndim == 1
    if squeeze:                      # match nn.Module behaviour on a single state
        x = x[None, :]
    B, in_f = x.shape
    hid = w1_p.shape[0]
    out_p = w2_p.shape[0]

    # Batch tile: multiple of 128 lanes.  Defensively clamp user block_b, use a
    # single step for tiny batches (launch-latency dominated), and guarantee
    # >= 2 grid steps for large batches so both v7x TensorCores get work.
    bl = max(LANE, _round_up(int(block_b), LANE))
    b_lanes = _round_up(B, LANE)
    if b_lanes <= 2 * LANE:
        tb = b_lanes
    else:
        tb = min(bl, _round_up(pl.cdiv(b_lanes, 2), LANE))
    bp = _round_up(B, tb)            # multiple of tb by construction

    # Single fused glue op: transpose + bf16 cast + batch-pad (features stay
    # unpadded; batch is the lane dim).  Padded columns are zero.
    x_t = jnp.zeros((in_f, bp), jnp.bfloat16).at[:, :B].set(
        x.T.astype(jnp.bfloat16))

    out_t = pl.pallas_call(
        _mlp_kernel,
        out_shape=jax.ShapeDtypeStruct((out_p, bp), jnp.float32),
        grid=(bp // tb,),
        in_specs=[
            pl.BlockSpec((in_f, tb), lambda i: (0, i)),      # x^T: blocked over batch lanes
            pl.BlockSpec((hid, in_f), lambda i: (0, 0)),     # weights/biases stay resident
            pl.BlockSpec((hid, 1), lambda i: (0, 0)),
            pl.BlockSpec((out_p, hid), lambda i: (0, 0)),
            pl.BlockSpec((out_p, 1), lambda i: (0, 0)),
        ],
        out_specs=pl.BlockSpec((out_p, tb), lambda i: (0, i)),
        compiler_params=pltpu.CompilerParams(
            dimension_semantics=("parallel",),
        ),
    )(x_t, w1_p, b1_p, w2_p, b2_p)

    # Slice away row/column padding and return row-major (B, out_features).
    out = out_t[:out_features, :B].T
    return out[0] if squeeze else out


def _torch_linear_init(key, out_features, in_features):
    """Deterministic init matching nn.Linear default: U(-k, k), k=1/sqrt(fan_in)."""
    k = 1.0 / jnp.sqrt(jnp.float32(in_features))
    kw, kb = jax.random.split(key)
    w = jax.random.uniform(kw, (out_features, in_features), jnp.float32, -k, k)
    b = jax.random.uniform(kb, (out_features,), jnp.float32, -k, k)
    return w, b


def _reference_f32(x, w1, b1, w2, b2):
    h = jnp.maximum(x @ w1.T + b1, 0.0)
    return h @ w2.T + b2


def _reference_bf16(x, w1, b1, w2, b2):
    # Same bf16-operand / f32-accumulate arithmetic as the kernel.
    h = jnp.dot(x.astype(jnp.bfloat16), w1.T.astype(jnp.bfloat16),
                preferred_element_type=jnp.float32) + b1
    h = jnp.maximum(h, 0.0).astype(jnp.bfloat16)
    return jnp.dot(h, w2.T.astype(jnp.bfloat16),
                   preferred_element_type=jnp.float32) + b2


def _check(x, w1, b1, w2, b2, params, output_size):
    out = linear_qnet_forward(x, *params, out_features=output_size)
    out = jax.block_until_ready(out)
    assert out.shape == (x.shape[0], output_size)
    ref_bf = _reference_bf16(x, w1, b1, w2, b2)
    assert jnp.allclose(out, ref_bf, atol=1e-4, rtol=1e-4), "mismatch vs bf16 reference"
    ref_f32 = _reference_f32(x, w1, b1, w2, b2)
    assert jnp.allclose(out, ref_f32, atol=5e-2, rtol=5e-2), "mismatch vs f32 reference"
    return out


if __name__ == "__main__":
    # Small shapes consistent with Linear_QNet(input_size, hidden_size, output_size)
    batch, input_size, hidden_size, output_size = 8, 16, 32, 4

    key = jax.random.PRNGKey(0)
    kx, k1, k2 = jax.random.split(key, 3)

    x = jax.random.normal(kx, (batch, input_size), jnp.float32)
    w1, b1 = _torch_linear_init(k1, hidden_size, input_size)
    w2, b2 = _torch_linear_init(k2, output_size, hidden_size)

    # One-time parameter prep, then forward.
    params = prepare_params(w1, b1, w2, b2)
    _check(x, w1, b1, w2, b2, params, output_size)

    # Also exercise the multi-step (2-TensorCore-capable) grid path with batch padding.
    x_big = jax.random.normal(jax.random.PRNGKey(1), (384, input_size), jnp.float32)
    _check(x_big, w1, b1, w2, b2, params, output_size)

    # TODO(synk): Linear_QNet.save (torch.save checkpoint I/O) is host-side and
    # has no Pallas equivalent.
    print("KERNEL_OK")
</pallas_src>

<mosaic_0001>
module attributes {stable_mosaic.version = 11 : i64} {
  func.func @_mlp_kernel(%arg0: i32, %arg1: memref<16x128xbf16, #tpu.memory_space<vmem>>, %arg2: memref<32x16xbf16, #tpu.memory_space<vmem>>, %arg3: memref<32x1xf32, #tpu.memory_space<vmem>>, %arg4: memref<8x32xbf16, #tpu.memory_space<vmem>>, %arg5: memref<8x1xf32, #tpu.memory_space<vmem>>, %arg6: memref<8x128xf32, #tpu.memory_space<vmem>>) attributes {dimension_semantics = [#tpu.dimension_semantics<parallel>], iteration_bounds = array<i64: 1>, scalar_prefetch = 0 : i64, scratch_operands = 0 : i64, tpu.core_type = #tpu.core_type<tc>, window_params = [{transform_indices = @transform_0, window_bounds = array<i64: 16, 128>}, {pipeline_mode = #tpu.pipeline_mode<synchronous>, transform_indices = @transform_1, window_bounds = array<i64: 32, 16>}, {pipeline_mode = #tpu.pipeline_mode<synchronous>, transform_indices = @transform_2, window_bounds = array<i64: 32, 1>}, {pipeline_mode = #tpu.pipeline_mode<synchronous>, transform_indices = @transform_3, window_bounds = array<i64: 8, 32>}, {pipeline_mode = #tpu.pipeline_mode<synchronous>, transform_indices = @transform_4, window_bounds = array<i64: 8, 1>}, {transform_indices = @transform_5, window_bounds = array<i64: 8, 128>}]} {
    %c0 = arith.constant 0 : index
    %c0_0 = arith.constant 0 : index
    %0 = vector.load %arg2[%c0, %c0_0] : memref<32x16xbf16, #tpu.memory_space<vmem>>, vector<32x16xbf16>
    %c0_1 = arith.constant 0 : index
    %c0_2 = arith.constant 0 : index
    %1 = vector.load %arg1[%c0_1, %c0_2] : memref<16x128xbf16, #tpu.memory_space<vmem>>, vector<16x128xbf16>
    %cst = arith.constant dense<0.000000e+00> : vector<32x128xf32>
    %2 = tpu.matmul %0, %1, %cst {dimension_numbers = #tpu.dot_dimension_numbers<[1], [0], [0], [1], [0, 0, 1, 1], [], []>} : vector<32x16xbf16>, vector<16x128xbf16>, vector<32x128xf32> -> vector<32x128xf32>
    %c0_3 = arith.constant 0 : index
    %c0_4 = arith.constant 0 : index
    %3 = vector.load %arg3[%c0_3, %c0_4] : memref<32x1xf32, #tpu.memory_space<vmem>>, vector<32x1xf32>
    %4 = vector.broadcast %3 : vector<32x1xf32> to vector<32x128xf32>
    %5 = arith.addf %2, %4 : vector<32x128xf32>
    %cst_5 = arith.constant 0.000000e+00 : f32
    %6 = vector.broadcast %cst_5 : f32 to vector<32x128xf32>
    %7 = arith.maximumf %5, %6 : vector<32x128xf32>
    %c0_6 = arith.constant 0 : index
    %c0_7 = arith.constant 0 : index
    %8 = vector.load %arg4[%c0_6, %c0_7] : memref<8x32xbf16, #tpu.memory_space<vmem>>, vector<8x32xbf16>
    %9 = arith.truncf %7 : vector<32x128xf32> to vector<32x128xbf16>
    %cst_8 = arith.constant dense<0.000000e+00> : vector<8x128xf32>
    %10 = tpu.matmul %8, %9, %cst_8 {dimension_numbers = #tpu.dot_dimension_numbers<[1], [0], [0], [1], [0, 0, 1, 1], [], []>} : vector<8x32xbf16>, vector<32x128xbf16>, vector<8x128xf32> -> vector<8x128xf32>
    %c0_9 = arith.constant 0 : index
    %c0_10 = arith.constant 0 : index
    %11 = vector.load %arg5[%c0_9, %c0_10] : memref<8x1xf32, #tpu.memory_space<vmem>>, vector<8x1xf32>
    %12 = vector.broadcast %11 : vector<8x1xf32> to vector<8x128xf32>
    %13 = arith.addf %10, %12 : vector<8x128xf32>
    %c0_11 = arith.constant 0 : index
    %c0_12 = arith.constant 0 : index
    %14 = vector.load %arg6[%c0_11, %c0_12] : memref<8x128xf32, #tpu.memory_space<vmem>>, vector<8x128xf32>
    tpu.vector_store %arg6[%c0_11, %c0_12], %13 {strides = array<i32>} : memref<8x128xf32, #tpu.memory_space<vmem>>, vector<8x128xf32>,
    return
  }
  func.func @transform_0(%arg0: i32) -> (i32, i32) {
    %c0_i32 = arith.constant 0 : i32
    %c0_i32_0 = arith.constant 0 : i32
    return %c0_i32, %arg0 : i32, i32
  }
  func.func @transform_1(%arg0: i32) -> (i32, i32) {
    %c0_i32 = arith.constant 0 : i32
    %c0_i32_0 = arith.constant 0 : i32
    %c0_i32_1 = arith.constant 0 : i32
    return %c0_i32, %c0_i32_0 : i32, i32
  }
  func.func @transform_2(%arg0: i32) -> (i32, i32) {
    %c0_i32 = arith.constant 0 : i32
    %c0_i32_0 = arith.constant 0 : i32
    %c0_i32_1 = arith.constant 0 : i32
    return %c0_i32, %c0_i32_0 : i32, i32
  }
  func.func @transform_3(%arg0: i32) -> (i32, i32) {
    %c0_i32 = arith.constant 0 : i32
    %c0_i32_0 = arith.constant 0 : i32
    %c0_i32_1 = arith.constant 0 : i32
    return %c0_i32, %c0_i32_0 : i32, i32
  }
  func.func @transform_4(%arg0: i32) -> (i32, i32) {
    %c0_i32 = arith.constant 0 : i32
    %c0_i32_0 = arith.constant 0 : i32
    %c0_i32_1 = arith.constant 0 : i32
    return %c0_i32, %c0_i32_0 : i32, i32
  }
  func.func @transform_5(%arg0: i32) -> (i32, i32) {
    %c0_i32 = arith.constant 0 : i32
    %c0_i32_0 = arith.constant 0 : i32
    return %c0_i32, %arg0 : i32, i32
  }
}

</mosaic_0001>

<llo_original>
// kernel: linear_qnet_forward.1
$region0: #{linear_qnet_forward.1}
  #allocation0 [shape = 'u32[]', space=smem, size = 0x4, offset = 0x4, fixed_abs, tag = 'smem constant byte address 0x4 - core index']
  #allocation1 [shape = 'u32[144,128]{1,0:T(1,128)}', space=vmem, size = 0x12000, scoped, tag = 'internal scratch']
  %s0 = inlined_call_operand.vmem [shape: bf16[16,128], index: 0, kind: input, shape index: {}]
  %s1 = inlined_call_operand.vmem [shape: bf16[32,16], index: 1, kind: input, shape index: {}]
  %s2 = inlined_call_operand.vmem [shape: f32[32,1], index: 2, kind: input, shape index: {}]
  %s3 = inlined_call_operand.vmem [shape: bf16[8,32], index: 3, kind: input, shape index: {}]
  %s4 = inlined_call_operand.vmem [shape: f32[8,1], index: 4, kind: input, shape index: {}]
  %s5 = inlined_call_operand.vmem [shape: f32[8,128], index: 5, kind: output, shape index: {}]
  %s6 = sld [smem:[#allocation0]]
  $region30: #{linear_qnet_forward.1} parent=0
    _
  %s8 = ssub.s32 1, %s6
  %s9 = scalar_select 0, %s8, %s6
  // Predicated region
  $region2: #{linear_qnet_forward.1} parent=0 // pred_check
    _
  $region3: #{linear_qnet_forward.1} parent=0 // pred_check_branch
    %11 = sbr.rel (0) target = $region5
  $region4: #{linear_qnet_forward.1} parent=0 // pred_region
    _
  $region5: #{linear_qnet_forward.1} parent=0 // pred_fallthru
    _
  // Predicated region
  $region6: #{linear_qnet_forward.1} parent=0 // pred_check
    _
  $region7: #{linear_qnet_forward.1} parent=0 // pred_check_branch
    %13 = sbr.rel (0) target = $region9
  $region8: #{linear_qnet_forward.1} parent=0 // pred_region
    _
  $region9: #{linear_qnet_forward.1} parent=0 // pred_fallthru
    _
  // Predicated region
  $region10: #{linear_qnet_forward.1} parent=0 // pred_check
    _
  $region11: #{linear_qnet_forward.1} parent=0 // pred_check_branch
    %15 = sbr.rel (0) target = $region13
  $region12: #{linear_qnet_forward.1} parent=0 // pred_region
    _
  $region13: #{linear_qnet_forward.1} parent=0 // pred_fallthru
    _
  // Predicated region
  $region14: #{linear_qnet_forward.1} parent=0 // pred_check
    _
  $region15: #{linear_qnet_forward.1} parent=0 // pred_check_branch
    %17 = sbr.rel (0) target = $region17
  $region16: #{linear_qnet_forward.1} parent=0 // pred_region
    _
  $region17: #{linear_qnet_forward.1} parent=0 // pred_fallthru
    _
  // Predicated region
  $region18: #{linear_qnet_forward.1} parent=0 // pred_check
    _
  $region19: #{linear_qnet_forward.1} parent=0 // pred_check_branch
    %19 = sbr.rel (0) target = $region21
  $region20: #{linear_qnet_forward.1} parent=0 // pred_region
    _
  $region21: #{linear_qnet_forward.1} parent=0 // pred_fallthru
    _
  %v21 = vld [vmem:[%s1] sm:$0xf]
  %v22 = vld [vmem:[%s1 + $0x4] sm:$0xf]
  %v23 = vld [vmem:[%s1 + $0x8] sm:$0xf]
  %v24 = vld [vmem:[%s1 + $0xc] sm:$0xf]
  %v25 = vld [vmem:[%s0] sm:$0xf]
  %v26 = vld [vmem:[%s0 + $0x4] sm:$0xf]
  %v27 = vld [vmem:[%s2] sm:$0xff]
  %v28 = vld [vmem:[%s2 + $0x8] sm:$0xff]
  %v29 = vld [vmem:[%s2 + $0x10] sm:$0xff]
  %v30 = vld [vmem:[%s2 + $0x18] sm:$0xff]
  %32 = vset.pattern.permute.xlu0 0
  %33 = vperm.xlu0 %32, %v27
  %v34 = vpop.permute.xlu0 %33
  %37 = vset.pattern.permute.xlu0 0
  %38 = vperm.xlu0 %37, %v28
  %v39 = vpop.permute.xlu0 %38
  %42 = vset.pattern.permute.xlu0 0
  %43 = vperm.xlu0 %42, %v29
  %v44 = vpop.permute.xlu0 %43
  %47 = vset.pattern.permute.xlu0 0
  %48 = vperm.xlu0 %47, %v30
  %v49 = vpop.permute.xlu0 %48
  %v55 = vunpack.c.l.b16 %v21
  %v56 = vunpack.c.l.b16 %v22
  %v57 = vunpack.c.l.b16 %v23
  %v58 = vunpack.c.l.b16 %v24
  %v59 = vpack.c.b16 %v56, %v55
  %v60 = vpack.c.b16 %v58, %v57
  %v63 = vunpack.c.l.b16 %v25
  %v64 = vunpack.c.l.b16 %v26
  %v65 = vpack.c.b16 %v64, %v63
  %vm67 = vcmask 130048
  %v69 = vsel %vm67, %v59, 0
  %v72 = vsel %vm67, %v60, 0
  %74 = vmatprep.subr.bf16.mxu0 0
  %75 = vmatpush1.bf16.msra.mxu0 %v65
  %76 = vmatprep.subr.bf16.mxu0 0
  %77 = vmatpush1.bf16.msra.mxu0 0
  %78 = vmatprep.subr.bf16.mxu0 0
  %79 = vmatpush1.bf16.msra.mxu0 0
  %80 = vmatprep.subr.bf16.mxu0 0
  %81 = vmatpush1.bf16.msra.mxu0 0
  %82 = vmatprep.subr.bf16.mxu0 0
  %83 = vmatpush1.bf16.msra.mxu0 0
  %84 = vmatprep.subr.bf16.mxu0 0
  %85 = vmatpush1.bf16.msra.mxu0 0
  %86 = vmatprep.subr.bf16.mxu0 0
  %87 = vmatpush1.bf16.msra.mxu0 0
  %88 = vmatprep.subr.bf16.mxu0 0
  %89 = vmatpush1.bf16.msra.mxu0 0
  %90 = vmatprep.subr.bf16.mxu0 0
  %91 = vmatpush1.bf16.msra.mxu0 0
  %92 = vmatprep.subr.bf16.mxu0 0
  %93 = vmatpush1.bf16.msra.mxu0 0
  %94 = vmatprep.subr.bf16.mxu0 0
  %95 = vmatpush1.bf16.msra.mxu0 0
  %96 = vmatprep.subr.bf16.mxu0 0
  %97 = vmatpush1.bf16.msra.mxu0 0
  %98 = vmatprep.subr.bf16.mxu0 0
  %99 = vmatpush1.bf16.msra.mxu0 0
  %100 = vmatprep.subr.bf16.mxu0 0
  %101 = vmatpush1.bf16.msra.mxu0 0
  %102 = vmatprep.subr.bf16.mxu0 0
  %103 = vmatpush1.bf16.msra.mxu0 0
  %104 = vmatprep.subr.bf16.mxu0 0
  %105 = vmatpush1.bf16.msra.mxu0 0
  %106 = vmatprep.mubr.bf16.mxu0 0
  %107 = vmatmul.mubr.bf16.gmra.mrb[0].mxu0 %v69
  %v108 = vpop.f32.mrb[0].mxu0
  %v109 = vadd.f32 %v34, %v108
  %v110 = vpop.f32.mrb[0].mxu0
  %v111 = vpop.f32.mrb[0].mxu0
  %v112 = vadd.f32 %v39, %v111
  %v113 = vpop.f32.mrb[0].mxu0
  %114 = vmatprep.mubr.bf16.mxu0 0
  %115 = vmatmul.mubr.bf16.gmra.mrb[0].mxu0 %v72
  %v116 = vpop.f32.mrb[0].mxu0
  %v117 = vadd.f32 %v44, %v116
  %v118 = vpop.f32.mrb[0].mxu0
  %v119 = vpop.f32.mrb[0].mxu0
  %v120 = vadd.f32 %v49, %v119
  %v121 = vpop.f32.mrb[0].mxu0
  %122 = vdwg.mxu0
  %v123 = vmax.f32 %v109, 0.0
  %v124 = vmax.f32 %v112, 0.0
  %v125 = vmax.f32 %v117, 0.0
  %v126 = vmax.f32 %v120, 0.0
  %v127 = vld [vmem:[%s3] sm:$0xf]
  %v128 = vpack.c.bf16 %v124, %v123
  %v129 = vpack.c.bf16 %v126, %v125
  %v130 = vld [vmem:[%s4] sm:$0xff]
  %132 = vset.pattern.permute.xlu0 0
  %133 = vperm.xlu0 %132, %v130
  %v134 = vpop.permute.xlu0 %133
  %vm136 = vcmask 261120
  %v138 = vsel %vm136, %v127, 0
  %140 = vmatprep.subr.bf16.mxu0 0
  %141 = vmatpush1.bf16.msra.mxu0 %v128
  %142 = vmatprep.subr.bf16.mxu0 0
  %143 = vmatpush1.bf16.msra.mxu0 %v129
  %144 = vmatprep.subr.bf16.mxu0 0
  %145 = vmatpush1.bf16.msra.mxu0 0
  %146 = vmatprep.subr.bf16.mxu0 0
  %147 = vmatpush1.bf16.msra.mxu0 0
  %148 = vmatprep.subr.bf16.mxu0 0
  %149 = vmatpush1.bf16.msra.mxu0 0
  %150 = vmatprep.subr.bf16.mxu0 0
  %151 = vmatpush1.bf16.msra.mxu0 0
  %152 = vmatprep.subr.bf16.mxu0 0
  %153 = vmatpush1.bf16.msra.mxu0 0
  %154 = vmatprep.subr.bf16.mxu0 0
  %155 = vmatpush1.bf16.msra.mxu0 0
  %156 = vmatprep.subr.bf16.mxu0 0
  %157 = vmatpush1.bf16.msra.mxu0 0
  %158 = vmatprep.subr.bf16.mxu0 0
  %159 = vmatpush1.bf16.msra.mxu0 0
  %160 = vmatprep.subr.bf16.mxu0 0
  %161 = vmatpush1.bf16.msra.mxu0 0
  %162 = vmatprep.subr.bf16.mxu0 0
  %163 = vmatpush1.bf16.msra.mxu0 0
  %164 = vmatprep.subr.bf16.mxu0 0
  %165 = vmatpush1.bf16.msra.mxu0 0
  %166 = vmatprep.subr.bf16.mxu0 0
  %167 = vmatpush1.bf16.msra.mxu0 0
  %168 = vmatprep.subr.bf16.mxu0 0
  %169 = vmatpush1.bf16.msra.mxu0 0
  %170 = vmatprep.subr.bf16.mxu0 0
  %171 = vmatpush1.bf16.msra.mxu0 0
  %172 = vmatprep.mubr.bf16.mxu0 0
  %173 = vmatmul.mubr.bf16.gmra.mrb[0].mxu0 %v138
  %v174 = vpop.f32.mrb[0].mxu0
  %v175 = vadd.f32 %v134, %v174
  %v176 = vpop.f32.mrb[0].mxu0
  %v177 = vpop.f32.mrb[0].mxu0
  %v178 = vpop.f32.mrb[0].mxu0
  %179 = vdwg.mxu0
  %180 = vst [vmem:[%s5] sm:$0xff] %v175
  // Predicated region
  $region22: #{linear_qnet_forward.1} parent=0 // pred_check
    _
  $region23: #{linear_qnet_forward.1} parent=0 // pred_check_branch
    %182 = sbr.rel (0) target = $region25
  $region24: #{linear_qnet_forward.1} parent=0 // pred_region
    _
  $region25: #{linear_qnet_forward.1} parent=0 // pred_fallthru
    _
  // Predicated region
  $region26: #{linear_qnet_forward.1} parent=0 // pred_check
    _
  $region27: #{linear_qnet_forward.1} parent=0 // pred_check_branch
    %184 = sbr.rel (0) target = $region29
  $region28: #{linear_qnet_forward.1} parent=0 // pred_region
    _
  $region29: #{linear_qnet_forward.1} parent=0 // pred_fallthru
    _

</llo_original>
